<compile_context>
chip_gen: v7x
topology: tpu7x:2x2x1
jax: 0.10.0
libtpu: 0.0.40
codegen_flags: <defaults>
</compile_context>

<pallas_src>
import math
import functools

import jax
import jax.numpy as jnp
from jax.experimental import pallas as pl
from jax.experimental.pallas import tpu as pltpu

# Pooling hyper-parameters (fixed by the PyTorch module, dim=2 branch)
KH, KW = 7, 8
SH, SW = 10, 11
PH, PW = 2, 2
CEIL_MODE = True
COUNT_INCLUDE_PAD = False

_LANE = 128
_VMEM_BLOCK_BUDGET = 16 * 1024 * 1024   # bytes for double-buffered in+out blocks
_VMEM_LIMIT_BYTES = 32 * 1024 * 1024    # scoped VMEM limit passed to Mosaic


def _pool_out_size(size, k, s, p, ceil_mode):
    """PyTorch pooling output-size formula (incl. ceil_mode start-inside rule)."""
    if ceil_mode:
        out = math.ceil((size + 2 * p - k) / s) + 1
        # PyTorch: the last window must start inside the input or left padding.
        if (out - 1) * s >= size + p:
            out -= 1
    else:
        out = (size + 2 * p - k) // s + 1
    return out


def _choose_channel_tile(C, H, W, H_out, W_out, itemsize):
    """Pick a channel tile so double-buffered (in + out) blocks fit the VMEM budget."""
    per_c = 2 * (H * W + H_out * W_out) * itemsize   # bytes/channel, double-buffered
    if C * per_c <= _VMEM_BLOCK_BUDGET:
        return C, C                                  # no channel tiling needed
    tc = max(_LANE, (_VMEM_BLOCK_BUDGET // per_c) // _LANE * _LANE)
    # TODO(synk): add an H-strip grid axis for inputs whose (H, W, 128) slab still
    # exceeds the VMEM budget; windows do not overlap (stride > kernel) so strips
    # along output rows would be straightforward.
    c_pad = pl.cdiv(C, tc) * tc
    return tc, c_pad


def _avgpool2d_nhwc_kernel(x_ref, o_ref, *, H, W, H_out, W_out):
    # x_ref: (1, H, W, TC) block in VMEM (C on lanes, W on sublanes)
    # o_ref: (1, H_out, W_out, TC) block (lane-dense last dim)
    # H_out * W_out is small here, so a fully unrolled static double loop is fine;
    # for large outputs switch to lax.fori_loop(..., unroll=True) over row chunks.
    tc = o_ref.shape[-1]
    for oh in range(H_out):
        for ow in range(W_out):
            # Window start in padded coordinates (may be negative / past end).
            hs0 = oh * SH - PH
            ws0 = ow * SW - PW
            # Clip window end to the padded extent (ceil_mode semantics).
            he_pad = min(hs0 + KH, H + PH)
            we_pad = min(ws0 + KW, W + PW)
            # Clip to the real (unpadded) input for the summation.
            hs = max(hs0, 0)
            ws = max(ws0, 0)
            he = min(he_pad, H)
            we = min(we_pad, W)

            if COUNT_INCLUDE_PAD:
                div = (he_pad - hs0) * (we_pad - ws0)
            else:
                div = (he - hs) * (we - ws)

            # Guard: a ceil_mode window that lies entirely in padding would give
            # div == 0; PyTorch writes 0 there. All of this is static Python.
            if he <= hs or we <= ws or div <= 0:
                o_ref[0, oh, ow, :] = jnp.zeros((tc,), o_ref.dtype)
                continue

            window = x_ref[0, hs:he, ws:we, :].astype(jnp.float32)  # (kh, kw, TC)
            s = jnp.sum(window, axis=(0, 1))                        # (TC,) per-lane
            inv_div = 1.0 / float(div)                              # folded constant
            o_ref[0, oh, ow, :] = (s * inv_div).astype(o_ref.dtype)


def avgpool2d(x):
    N, C, H, W = x.shape
    H_out = _pool_out_size(H, KH, SH, PH, CEIL_MODE)
    W_out = _pool_out_size(W, KW, SW, PW, CEIL_MODE)

    itemsize = jnp.dtype(x.dtype).itemsize
    TC, C_pad = _choose_channel_tile(C, H, W, H_out, W_out, itemsize)

    # Relayout to channels-last (NHWC) so C maps to the 128-lane axis.
    x_nhwc = jnp.transpose(x, (0, 2, 3, 1))
    if C_pad != C:
        x_nhwc = jnp.pad(x_nhwc, ((0, 0), (0, 0), (0, 0), (0, C_pad - C)))

    kernel = functools.partial(
        _avgpool2d_nhwc_kernel, H=H, W=W, H_out=H_out, W_out=W_out
    )

    cost = pl.CostEstimate(
        flops=N * C_pad * H_out * W_out * (KH * KW + 1),
        transcendentals=0,
        bytes_accessed=(N * C_pad * H * W + N * C_pad * H_out * W_out) * itemsize,
    )

    y_nhwc = pl.pallas_call(
        kernel,
        out_shape=jax.ShapeDtypeStruct((N, H_out, W_out, C_pad), x.dtype),
        grid=(N, C_pad // TC),
        in_specs=[pl.BlockSpec((1, H, W, TC), lambda n, c: (n, 0, 0, c))],
        out_specs=pl.BlockSpec((1, H_out, W_out, TC), lambda n, c: (n, 0, 0, c)),
        compiler_params=pltpu.CompilerParams(
            dimension_semantics=("parallel", "parallel"),
            vmem_limit_bytes=_VMEM_LIMIT_BYTES,
        ),
        cost_estimate=cost,
    )(x_nhwc)

    # Drop channel padding and go back to PyTorch's NCHW layout.
    y_nhwc = y_nhwc[..., :C]
    return jnp.transpose(y_nhwc, (0, 3, 1, 2))


if __name__ == "__main__":
    key = jax.random.PRNGKey(0)
    # Matches PyTorch NCHW conv-style input; small shapes: batch=2, channels=4, 16x16.
    x = jax.random.normal(key, (2, 4, 16, 16), dtype=jnp.float32)
    y = avgpool2d(x)
    jax.block_until_ready(y)
    assert y.shape == (2, 4, 2, 2), y.shape
    print("KERNEL_OK")
</pallas_src>

<mosaic_0001>
module attributes {stable_mosaic.version = 11 : i64} {
  func.func @_avgpool2d_nhwc_kernel(%arg0: i32, %arg1: i32, %arg2: memref<1x16x16x4xf32, #tpu.memory_space<vmem>>, %arg3: memref<1x2x2x4xf32, #tpu.memory_space<vmem>>) attributes {dimension_semantics = [#tpu.dimension_semantics<parallel>, #tpu.dimension_semantics<parallel>], iteration_bounds = array<i64: 2, 1>, scalar_prefetch = 0 : i64, scratch_operands = 0 : i64, tpu.core_type = #tpu.core_type<tc>, window_params = [{transform_indices = @transform_0, window_bounds = array<i64: 1, 16, 16, 4>}, {transform_indices = @transform_1, window_bounds = array<i64: 1, 2, 2, 4>}]} {
    %c0 = arith.constant 0 : index
    %c0_0 = arith.constant 0 : index
    %c0_1 = arith.constant 0 : index
    %c0_2 = arith.constant 0 : index
    %0 = vector.load %arg2[%c0, %c0_0, %c0_1, %c0_2] : memref<1x16x16x4xf32, #tpu.memory_space<vmem>>, vector<1x5x6x4xf32>
    %1 = vector.shape_cast %0 : vector<1x5x6x4xf32> to vector<5x6x4xf32>
    %cst = arith.constant dense<0.000000e+00> : vector<4xf32>
    %2 = vector.multi_reduction <add>, %1, %cst [0, 1] : vector<5x6x4xf32> to vector<4xf32>
    %cst_3 = arith.constant 0.0333333351 : f32
    %3 = vector.broadcast %cst_3 : f32 to vector<4xf32>
    %4 = arith.mulf %2, %3 : vector<4xf32>
    %c0_4 = arith.constant 0 : index
    %c0_5 = arith.constant 0 : index
    %c0_6 = arith.constant 0 : index
    %c0_7 = arith.constant 0 : index
    %5 = vector.load %arg3[%c0_4, %c0_5, %c0_6, %c0_7] : memref<1x2x2x4xf32, #tpu.memory_space<vmem>>, vector<1x1x1x4xf32>
    %6 = vector.shape_cast %5 : vector<1x1x1x4xf32> to vector<4xf32>
    %7 = vector.shape_cast %4 : vector<4xf32> to vector<1x1x1x4xf32>
    tpu.vector_store %arg3[%c0_4, %c0_5, %c0_6, %c0_7], %7 {strides = array<i32>} : memref<1x2x2x4xf32, #tpu.memory_space<vmem>>, vector<1x1x1x4xf32>,
    %c0_8 = arith.constant 0 : index
    %c0_9 = arith.constant 0 : index
    %c9 = arith.constant 9 : index
    %c0_10 = arith.constant 0 : index
    %8 = vector.load %arg2[%c0_8, %c0_9, %c9, %c0_10] : memref<1x16x16x4xf32, #tpu.memory_space<vmem>>, vector<1x5x7x4xf32>
    %9 = vector.shape_cast %8 : vector<1x5x7x4xf32> to vector<5x7x4xf32>
    %cst_11 = arith.constant dense<0.000000e+00> : vector<4xf32>
    %10 = vector.multi_reduction <add>, %9, %cst_11 [0, 1] : vector<5x7x4xf32> to vector<4xf32>
    %cst_12 = arith.constant 0.0285714287 : f32
    %11 = vector.broadcast %cst_12 : f32 to vector<4xf32>
    %12 = arith.mulf %10, %11 : vector<4xf32>
    %c0_13 = arith.constant 0 : index
    %c0_14 = arith.constant 0 : index
    %c1 = arith.constant 1 : index
    %c0_15 = arith.constant 0 : index
    %13 = vector.load %arg3[%c0_13, %c0_14, %c1, %c0_15] : memref<1x2x2x4xf32, #tpu.memory_space<vmem>>, vector<1x1x1x4xf32>
    %14 = vector.shape_cast %13 : vector<1x1x1x4xf32> to vector<4xf32>
    %15 = vector.shape_cast %12 : vector<4xf32> to vector<1x1x1x4xf32>
    tpu.vector_store %arg3[%c0_13, %c0_14, %c1, %c0_15], %15 {strides = array<i32>} : memref<1x2x2x4xf32, #tpu.memory_space<vmem>>, vector<1x1x1x4xf32>,
    %c0_16 = arith.constant 0 : index
    %c8 = arith.constant 8 : index
    %c0_17 = arith.constant 0 : index
    %c0_18 = arith.constant 0 : index
    %16 = vector.load %arg2[%c0_16, %c8, %c0_17, %c0_18] : memref<1x16x16x4xf32, #tpu.memory_space<vmem>>, vector<1x7x6x4xf32>
    %17 = vector.shape_cast %16 : vector<1x7x6x4xf32> to vector<7x6x4xf32>
    %cst_19 = arith.constant dense<0.000000e+00> : vector<4xf32>
    %18 = vector.multi_reduction <add>, %17, %cst_19 [0, 1] : vector<7x6x4xf32> to vector<4xf32>
    %cst_20 = arith.constant 0.0238095243 : f32
    %19 = vector.broadcast %cst_20 : f32 to vector<4xf32>
    %20 = arith.mulf %18, %19 : vector<4xf32>
    %c0_21 = arith.constant 0 : index
    %c1_22 = arith.constant 1 : index
    %c0_23 = arith.constant 0 : index
    %c0_24 = arith.constant 0 : index
    %21 = vector.load %arg3[%c0_21, %c1_22, %c0_23, %c0_24] : memref<1x2x2x4xf32, #tpu.memory_space<vmem>>, vector<1x1x1x4xf32>
    %22 = vector.shape_cast %21 : vector<1x1x1x4xf32> to vector<4xf32>
    %23 = vector.shape_cast %20 : vector<4xf32> to vector<1x1x1x4xf32>
    tpu.vector_store %arg3[%c0_21, %c1_22, %c0_23, %c0_24], %23 {strides = array<i32>} : memref<1x2x2x4xf32, #tpu.memory_space<vmem>>, vector<1x1x1x4xf32>,
    %c0_25 = arith.constant 0 : index
    %c8_26 = arith.constant 8 : index
    %c9_27 = arith.constant 9 : index
    %c0_28 = arith.constant 0 : index
    %24 = vector.load %arg2[%c0_25, %c8_26, %c9_27, %c0_28] : memref<1x16x16x4xf32, #tpu.memory_space<vmem>>, vector<1x7x7x4xf32>
    %25 = vector.shape_cast %24 : vector<1x7x7x4xf32> to vector<7x7x4xf32>
    %cst_29 = arith.constant dense<0.000000e+00> : vector<4xf32>
    %26 = vector.multi_reduction <add>, %25, %cst_29 [0, 1] : vector<7x7x4xf32> to vector<4xf32>
    %cst_30 = arith.constant 0.0204081628 : f32
    %27 = vector.broadcast %cst_30 : f32 to vector<4xf32>
    %28 = arith.mulf %26, %27 : vector<4xf32>
    %c0_31 = arith.constant 0 : index
    %c1_32 = arith.constant 1 : index
    %c1_33 = arith.constant 1 : index
    %c0_34 = arith.constant 0 : index
    %29 = vector.load %arg3[%c0_31, %c1_32, %c1_33, %c0_34] : memref<1x2x2x4xf32, #tpu.memory_space<vmem>>, vector<1x1x1x4xf32>
    %30 = vector.shape_cast %29 : vector<1x1x1x4xf32> to vector<4xf32>
    %31 = vector.shape_cast %28 : vector<4xf32> to vector<1x1x1x4xf32>
    tpu.vector_store %arg3[%c0_31, %c1_32, %c1_33, %c0_34], %31 {strides = array<i32>} : memref<1x2x2x4xf32, #tpu.memory_space<vmem>>, vector<1x1x1x4xf32>,
    return
  }
  func.func @transform_0(%arg0: i32, %arg1: i32) -> (i32, i32, i32, i32) {
    %c0_i32 = arith.constant 0 : i32
    %c0_i32_0 = arith.constant 0 : i32
    %c0_i32_1 = arith.constant 0 : i32
    return %arg0, %c0_i32, %c0_i32_0, %arg1 : i32, i32, i32, i32
  }
  func.func @transform_1(%arg0: i32, %arg1: i32) -> (i32, i32, i32, i32) {
    %c0_i32 = arith.constant 0 : i32
    %c0_i32_0 = arith.constant 0 : i32
    %c0_i32_1 = arith.constant 0 : i32
    return %arg0, %c0_i32, %c0_i32_0, %arg1 : i32, i32, i32, i32
  }
}

</mosaic_0001>

<llo_original>
// kernel: tpu_custom_call.1
$region0: #{tpu_custom_call.1}
  #allocation0 [shape = 'u32[]', space=smem, size = 0x4, offset = 0x4, fixed_abs, tag = 'smem constant byte address 0x4 - core index']
  #allocation1 [shape = 'u32[144,128]{1,0:T(1,128)}', space=vmem, size = 0x12000, scoped, tag = 'internal scratch']
  %s0 = inlined_call_operand.vmem [shape: f32[2,16,16,4], index: 0, kind: input, shape index: {}]
  %s1 = inlined_call_operand.hbm [shape: f32[2,2,2,4], index: 1, kind: output, shape index: {}]
  %s2 = sld [smem:[#allocation0]]
  $region37: #{tpu_custom_call.1} parent=0
    _
  %s4 = ssub.s32 1, %s2
  %s5 = scalar_select 0, %s4, %s2
  $region1: #{tpu_custom_call.1} parent=0
    #allocation2 [shape = 'u8[4096]{0}', space=vmem, size = 0x1000, scoped, tag = 'output window, operand 0']
    #allocation3 [shape = 's32[2]{0}', space=sflag, size = 0x8, scoped, tag = 'scoped memory for tpu_custom_call.1']
    %6 = vsyncpa [#allocation3], 0
    %s7 = scalar_lea.sflag [#allocation3], 1
    %8 = vsyncpa %s7, 0
    loop: start=0, step=1, limit=4
    $region2: #{tpu_custom_call.1} parent=1 // loop_pre_header
      _
    $region3: #{tpu_custom_call.1} parent=1 // loop_header
      %s10 = sphi 0, %s14
      %p11 = scmp.ge.s32.totalorder %s10, 4
      %s17 = sphi 0, %s29
      %s18 = sphi 0, %s25
      %s19 = sphi 0, %s17
      %s20 = sphi 0, %s18
      %s21 = sphi 0, %s19
      %s22 = sphi 0, %s20
      %s34 = sphi 0, %s36
      %s37 = sphi 0, %s34
      %s38 = sphi 0, %s37
      %s54 = sphi 0, %s38
      %s62 = sphi 0, %s64
      %s65 = sphi 0, %s62
      %s66 = sphi 0, %s65
      %s82 = sphi 0, %s66
    $region4: #{tpu_custom_call.1} parent=1 // loop_header_branch
      %13 = sbr.rel (%p11) target = $region8
    $region5: #{tpu_custom_call.1} parent=1 // loop_body
      %s15 = ssub.s32 %s10, 1
      %s16 = ssub.s32 %s10, 2
      %s23 = sadd.s32 1, %s18
      %p24 = scmp.ge.s32.totalorder %s23, 1
      %s25 = scalar_select %p24, 0, %s23
      %s26 = sadd.s32 1, %s17
      %s27 = scalar_select %p24, %s26, %s17
      %p28 = scmp.ge.s32.totalorder %s27, 2
      %s29 = scalar_select %p28, 0, %s27
      %s30 = ssub.s32 %s17, %s29
      %s31 = ssub.s32 %s18, %s25
      %s32 = sor.u32 %s30, %s31
      %p33 = scmp.eq.s32.totalorder %s32, 0
      %s35 = sadd.s32 %s34, 1
      %s36 = scalar_select %p33, %s34, %s35
      %p39 = pneg %p33
      %p40 = scmp.eq.s32.totalorder %s10, 1
      %p41 = por %p39, %p40
      %p42 = scmp.ne.s32.totalorder %s34, %s37
      %p43 = scmp.eq.s32.totalorder %s10, 0
      %p44 = por %p42, %p43
      %p45 = scmp.ne.s32.totalorder %s34, %s37
      %p46 = scmp.eq.s32.totalorder %s15, 1
      %p47 = por %p45, %p46
      %p48 = scmp.ne.s32.totalorder %s37, %s38
      %p49 = scmp.eq.s32.totalorder %s15, 0
      %p50 = por %p48, %p49
      %p51 = scmp.ne.s32.totalorder %s37, %s38
      %p52 = scmp.eq.s32.totalorder %s16, 1
      %p53 = por %p51, %p52
      %p55 = scmp.ne.s32.totalorder %s38, %s54
      %p56 = scmp.eq.s32.totalorder %s16, 0
      %p57 = por %p55, %p56
      %s58 = ssub.s32 %s17, %s29
      %s59 = ssub.s32 %s18, %s25
      %s60 = sor.u32 %s58, %s59
      %p61 = scmp.eq.s32.totalorder %s60, 0
      %s63 = sadd.s32 %s62, 1
      %s64 = scalar_select %p61, %s62, %s63
      %p67 = pneg %p61
      %p68 = scmp.eq.s32.totalorder %s10, 1
      %p69 = por %p67, %p68
      %p70 = scmp.ne.s32.totalorder %s62, %s65
      %p71 = scmp.eq.s32.totalorder %s10, 0
      %p72 = por %p70, %p71
      %p73 = scmp.ne.s32.totalorder %s62, %s65
      %p74 = scmp.eq.s32.totalorder %s15, 1
      %p75 = por %p73, %p74
      %p76 = scmp.ne.s32.totalorder %s65, %s66
      %p77 = scmp.eq.s32.totalorder %s15, 0
      %p78 = por %p76, %p77
      %p79 = scmp.ne.s32.totalorder %s65, %s66
      %p80 = scmp.eq.s32.totalorder %s16, 1
      %p81 = por %p79, %p80
      %p83 = scmp.ne.s32.totalorder %s66, %s82
      %p84 = scmp.eq.s32.totalorder %s16, 0
      %p85 = por %p83, %p84
      %p86 = scmp.le.s32.totalorder 1, %s10
      %p87 = scmp.lt.s32.totalorder %s10, 3
      %p88 = pnand %p86, %p87
      %p89 = pneg %p88
      // Predicated region
      $region9: #{tpu_custom_call.1} parent=5 // pred_check
        _
      $region10: #{tpu_custom_call.1} parent=5 // pred_check_branch
        %91 = sbr.rel (%p88) target = $region12
      $region11: #{tpu_custom_call.1} parent=5 // pred_region
        %s92 = ssub.s32 %s10, 1
      $region12: #{tpu_custom_call.1} parent=5 // pred_fallthru
        _
      %p93 = scmp.lt.s32.totalorder %s10, 2
      // Predicated region
      $region13: #{tpu_custom_call.1} parent=5 // pred_check
        %p94 = pneg %p93
      $region14: #{tpu_custom_call.1} parent=5 // pred_check_branch
        %96 = sbr.rel (%p94) target = $region16
      $region15: #{tpu_custom_call.1} parent=5 // pred_region
        // Predicated region
        $region17: #{tpu_custom_call.1} parent=15 // pred_check
          %p97 = pneg %p44
        $region18: #{tpu_custom_call.1} parent=15 // pred_check_branch
          %99 = sbr.rel (%p97) target = $region20
        $region19: #{tpu_custom_call.1} parent=15 // pred_region
          %p100 = scmp.lt.s32.totalorder %s17, 1
          %s101 = scalar_select %p100, %s17, 1
          %p102 = scmp.lt.s32.totalorder %s18, 0
          %s103 = scalar_select %p102, %s18, 0
          %s104 = smul.addr %s101, 32
          %s105 = sadd.s32 %s103, %s104
          %s106 = smul.addr %s105, 8
          %s107 = scalar_lea.vmem %s0, %s106
        $region20: #{tpu_custom_call.1} parent=15 // pred_fallthru
          _
      $region16: #{tpu_custom_call.1} parent=5 // pred_fallthru
        _
      %p108 = scmp.le.s32.totalorder 1, %s10
      %p109 = scmp.lt.s32.totalorder %s10, 3
      %p110 = pnand %p108, %p109
      %p111 = pneg %p110
      // Predicated region
      $region21: #{tpu_custom_call.1} parent=5 // pred_check
        _
      $region22: #{tpu_custom_call.1} parent=5 // pred_check_branch
        %113 = sbr.rel (%p110) target = $region24
      $region23: #{tpu_custom_call.1} parent=5 // pred_region
        %s114 = ssub.s32 %s10, 1
        %p115 = scmp.lt.s32.totalorder %s19, 1
        %s116 = scalar_select %p115, %s19, 1
        %p117 = scmp.lt.s32.totalorder %s20, 0
        %s118 = scalar_select %p117, %s20, 0
        %s119 = smul.addr %s116, 32
        %s120 = sadd.s32 %s118, %s119
        %s121 = smul.addr %s120, 8
        %s122 = scalar_lea.vmem %s0, %s121
        %p123 = pneg %p50
        %p124 = pneg %p47
        %p125 = pneg %p78
        %p126 = pneg %p75
        %s127 = sand.u32 %s65, 1
        %s128 = scalar_lea.sflag [#allocation3], %s127
        %s129 = sand.u32 %s65, 1
        %s130 = smul.addr %s129, 4
        %s131 = scalar_lea.vmem [#allocation2], %s130
        %p132 = scmp.lt.s32.totalorder %s19, 1
        %s133 = scalar_select %p132, %s19, 1
        %p134 = scmp.lt.s32.totalorder %s20, 0
        %s135 = scalar_select %p134, %s20, 0
        %s136 = smul.addr %s133, 32
        %s137 = sadd.s32 %s135, %s136
        %s138 = smul.addr %s137, 8
        %s139 = scalar_lea.vmem %s0, %s138
        %v140 = vld [vmem:[%s139] sm:$0x3f]
        %v141 = vld [vmem:[%s139 + $0x10] sm:$0x3f]
        %v142 = vld [vmem:[%s139 + $0x20] sm:$0x3f]
        %v143 = vld [vmem:[%s139 + $0x30] sm:$0x3f]
        %v144 = vld [vmem:[%s139 + $0x40] sm:$0x3f]
        %vm145 = vcmask 29696
        %v146 = vsel %vm145, %v140, 0.0
        %v147 = vsel %vm145, %v141, 0.0
        %v148 = vadd.f32 %v146, %v147
        %v149 = vsel %vm145, %v142, 0.0
        %v150 = vadd.f32 %v148, %v149
        %v151 = vsel %vm145, %v143, 0.0
        %v152 = vadd.f32 %v150, %v151
        %v153 = vsel %vm145, %v144, 0.0
        %v154 = vadd.f32 %v152, %v153
        %v155 = vrot.slane %v154, 4
        %v156 = vadd.f32 %v154, %v155
        %v157 = vrot.slane %v156, 2
        %v158 = vadd.f32 %v156, %v157
        %v159 = vrot.slane %v158, 1
        %v160 = vadd.f32 %v158, %v159
        %v161 = vmul.f32 %v160, 0.033333335
        %vm162 = vcmask 24576
        %163 = vst.msk [vmem:[%s131] sm:$0x1] %vm162, %v161
        %v164 = vld [vmem:[%s139 + $0x9] sm:$0x7f]
        %v165 = vld [vmem:[%s139 + $0x19] sm:$0x7f]
        %v166 = vld [vmem:[%s139 + $0x29] sm:$0x7f]
        %v167 = vld [vmem:[%s139 + $0x39] sm:$0x7f]
        %v168 = vld [vmem:[%s139 + $0x49] sm:$0x7f]
        %vm169 = vcmask 30720
        %v170 = vsel %vm169, %v164, 0.0
        %v171 = vsel %vm169, %v165, 0.0
        %v172 = vadd.f32 %v170, %v171
        %v173 = vsel %vm169, %v166, 0.0
        %v174 = vadd.f32 %v172, %v173
        %v175 = vsel %vm169, %v167, 0.0
        %v176 = vadd.f32 %v174, %v175
        %v177 = vsel %vm169, %v168, 0.0
        %v178 = vadd.f32 %v176, %v177
        %v179 = vrot.slane %v178, 4
        %v180 = vadd.f32 %v178, %v179
        %v181 = vrot.slane %v180, 2
        %v182 = vadd.f32 %v180, %v181
        %v183 = vrot.slane %v182, 1
        %v184 = vadd.f32 %v182, %v183
        %v185 = vmul.f32 %v184, 0.028571429
        %186 = vst.msk [vmem:[%s131 + $0x1] sm:$0x1] %vm162, %v185
        %s187 = scalar_lea.vmem %s139, 128
        %v188 = vld [vmem:[%s187] sm:$0x3f]
        %v189 = vld [vmem:[%s187 + $0x10] sm:$0x3f]
        %v190 = vld [vmem:[%s187 + $0x20] sm:$0x3f]
        %v191 = vld [vmem:[%s187 + $0x30] sm:$0x3f]
        %v192 = vld [vmem:[%s187 + $0x40] sm:$0x3f]
        %v193 = vld [vmem:[%s187 + $0x50] sm:$0x3f]
        %v194 = vld [vmem:[%s187 + $0x60] sm:$0x3f]
        %v195 = vsel %vm145, %v188, 0.0
        %v196 = vsel %vm145, %v189, 0.0
        %v197 = vadd.f32 %v195, %v196
        %v198 = vsel %vm145, %v190, 0.0
        %v199 = vadd.f32 %v197, %v198
        %v200 = vsel %vm145, %v191, 0.0
        %v201 = vadd.f32 %v199, %v200
        %v202 = vsel %vm145, %v192, 0.0
        %v203 = vadd.f32 %v201, %v202
        %v204 = vsel %vm145, %v193, 0.0
        %v205 = vadd.f32 %v203, %v204
        %v206 = vsel %vm145, %v194, 0.0
        %v207 = vadd.f32 %v205, %v206
        %v208 = vrot.slane %v207, 4
        %v209 = vadd.f32 %v207, %v208
        %v210 = vrot.slane %v209, 2
        %v211 = vadd.f32 %v209, %v210
        %v212 = vrot.slane %v211, 1
        %v213 = vadd.f32 %v211, %v212
        %v214 = vmul.f32 %v213, 0.023809524
        %s215 = scalar_lea.vmem %s131, 2 [#allocation2]
        %216 = vst.msk [vmem:[%s215] sm:$0x1] %vm162, %v214
        %v217 = vld [vmem:[%s187 + $0x9] sm:$0x7f]
        %v218 = vld [vmem:[%s187 + $0x19] sm:$0x7f]
        %v219 = vld [vmem:[%s187 + $0x29] sm:$0x7f]
        %v220 = vld [vmem:[%s187 + $0x39] sm:$0x7f]
        %v221 = vld [vmem:[%s187 + $0x49] sm:$0x7f]
        %v222 = vld [vmem:[%s187 + $0x59] sm:$0x7f]
        %v223 = vld [vmem:[%s187 + $0x69] sm:$0x7f]
        %v224 = vsel %vm169, %v217, 0.0
        %v225 = vsel %vm169, %v218, 0.0
        %v226 = vadd.f32 %v224, %v225
        %v227 = vsel %vm169, %v219, 0.0
        %v228 = vadd.f32 %v226, %v227
        %v229 = vsel %vm169, %v220, 0.0
        %v230 = vadd.f32 %v228, %v229
        %v231 = vsel %vm169, %v221, 0.0
        %v232 = vadd.f32 %v230, %v231
        %v233 = vsel %vm169, %v222, 0.0
        %v234 = vadd.f32 %v232, %v233
        %v235 = vsel %vm169, %v223, 0.0
        %v236 = vadd.f32 %v234, %v235
        %v237 = vrot.slane %v236, 4
        %v238 = vadd.f32 %v236, %v237
        %v239 = vrot.slane %v238, 2
        %v240 = vadd.f32 %v238, %v239
        %v241 = vrot.slane %v240, 1
        %v242 = vadd.f32 %v240, %v241
        %v243 = vmul.f32 %v242, 0.020408163
        %244 = vst.msk [vmem:[%s215 + $0x1] sm:$0x1] %vm162, %v243
        %s245 = sand.u32 %s65, 1
        %s246 = scalar_lea.sflag [#allocation3], %s245
        %s247 = sand.u32 %s65, 1
        %s248 = smul.addr %s247, 4
        %s249 = scalar_lea.vmem [#allocation2], %s248
        // Predicated region
        $region25: #{tpu_custom_call.1} parent=23 // pred_check
          %p250 = pneg %p75
        $region26: #{tpu_custom_call.1} parent=23 // pred_check_branch
          %252 = sbr.rel (%p250) target = $region28
        $region27: #{tpu_custom_call.1} parent=23 // pred_region
          %s254 = ssub.s32 64, 64
          %255 = vsyncadd %s246, %s254
          %s256 = smul.addr %s19, 2
          %s257 = sadd.s32 %s20, %s256
          %s258 = smul.addr %s257, 32
          %s259 = scalar_lea.hbm %s1, %s258
          %s260 = sshll.u32 %s249, 4
          %s261 = int_to_ptr.vmem [resolvable:$true] %s260
          %266 = dma.vmem_to_hbm [thread:$0]  %s261, 64, %s259, %s246, 32, 32, 2
        $region28: #{tpu_custom_call.1} parent=23 // pred_fallthru
          _
      $region24: #{tpu_custom_call.1} parent=5 // pred_fallthru
        _
      %p267 = scmp.le.s32.totalorder 2, %s10
      // Predicated region
      $region29: #{tpu_custom_call.1} parent=5 // pred_check
        %p268 = pneg %p267
      $region30: #{tpu_custom_call.1} parent=5 // pred_check_branch
        %270 = sbr.rel (%p268) target = $region32
      $region31: #{tpu_custom_call.1} parent=5 // pred_region
        %s271 = ssub.s32 %s10, 2
        // Predicated region
        $region33: #{tpu_custom_call.1} parent=31 // pred_check
          %p272 = pneg %p81
        $region34: #{tpu_custom_call.1} parent=31 // pred_check_branch
          %274 = sbr.rel (%p272) target = $region36
        $region35: #{tpu_custom_call.1} parent=31 // pred_region
          %s275 = sand.u32 %s66, 1
          %s276 = scalar_lea.sflag [#allocation3], %s275
          %s277 = sand.u32 %s66, 1
          %s278 = smul.addr %s277, 4
          %s279 = scalar_lea.vmem [#allocation2], %s278
          %280 = dma.done %s276, 64
        $region36: #{tpu_custom_call.1} parent=31 // pred_fallthru
          _
      $region32: #{tpu_custom_call.1} parent=5 // pred_fallthru
        _
    $region6: #{tpu_custom_call.1} parent=1 // loop_footer
      %s14 = sadd.s32 1, %s10
    $region7: #{tpu_custom_call.1} parent=1 // loop_footer_branch
      %9 = sbr.rel target = $region3
    $region8: #{tpu_custom_call.1} parent=1 // loop_exit
      _
    %281 = vsyncpa [#allocation3], 1
    %s282 = scalar_lea.sflag [#allocation3], 1
    %283 = vsyncpa %s282, 1

</llo_original>
